<compile_context>
chip_gen: v7x
topology: tpu7x:2x2x1
jax: 0.10.0
libtpu: 0.0.40
codegen_flags: <defaults>
</compile_context>

<pallas_src>
import functools
import math

import jax
import jax.numpy as jnp
from jax import lax
from jax.experimental import pallas as pl
from jax.experimental.pallas import tpu as pltpu


# ---------------------------------------------------------------------------
# Helpers
# ---------------------------------------------------------------------------
def _round_up(n, m):
    return ((n + m - 1) // m) * m


def _vmem_budget_bytes():
    # Generation-aware VMEM budget: 128 MiB on v5e/v6e, 64 MiB per core on v7x.
    # Keep ~25% headroom for compiler scratch / pipeline slack.
    try:
        cap = int(pltpu.get_tpu_info().vmem_capacity_bytes)
    except Exception:
        cap = 64 * 1024 * 1024  # conservative fallback (v7x-sized)
    return max(int(cap * 0.75), 32 * 1024 * 1024)


# ---------------------------------------------------------------------------
# Kernels
# ---------------------------------------------------------------------------
def _matmul_resident_kernel(x_ref, w_ref, o_ref):
    # x_ref: (tm, K) bf16, w_ref: (K, Ep) bf16 grid-invariant (fetched once),
    # o_ref: (tm, Ep) f32. Single MXU dot, f32 accumulation, direct store.
    o_ref[...] = jnp.dot(x_ref[...], w_ref[...],
                         preferred_element_type=jnp.float32)


def _matmul_ktiled_kernel(x_ref, w_ref, o_ref, *, K, tk):
    # Large-vocab fallback: accumulate straight into the f32 output block
    # (resident across the K grid axis) -- no acc scratch, no final copy.
    k = pl.program_id(1)

    @pl.when(k == 0)
    def _():
        o_ref[...] = jnp.zeros_like(o_ref)

    x = x_ref[...]
    if K % tk != 0:
        # Ragged last K block: zero the out-of-range columns so the matching
        # (undefined) weight rows contribute nothing.
        rem = K - k * tk
        col = lax.broadcasted_iota(jnp.int32, x.shape, 1)
        x = jnp.where(col < rem, x, jnp.zeros_like(x))

    o_ref[...] += jnp.dot(x, w_ref[...], preferred_element_type=jnp.float32)


def _gather_dma_kernel(ids_ref, w_hbm, o_ref, sem):
    # ids_ref: (Mp,) int32 in SMEM (scalar-prefetched, pre-clamped)
    # w_hbm:   (K, E) full embedding table left in HBM (memory_space=pl.ANY)
    # o_ref:   (tm, E) VMEM output block, filled row-by-row via DMA
    # sem:     (1,) DMA semaphore shared by all row copies (same size each)
    i = pl.program_id(0)
    tm = o_ref.shape[0]
    base = i * tm

    def issue(j, carry):
        row = ids_ref[base + j]
        pltpu.make_async_copy(
            w_hbm.at[pl.ds(row, 1), :], o_ref.at[pl.ds(j, 1), :], sem.at[0]
        ).start()
        return carry

    lax.fori_loop(0, tm, issue, 0)

    def drain(j, carry):
        # All row copies have identical byte counts, so reconstructing the
        # descriptor is enough to wait for one completion each.
        pltpu.make_async_copy(
            w_hbm.at[pl.ds(0, 1), :], o_ref.at[pl.ds(0, 1), :], sem.at[0]
        ).wait()
        return carry

    lax.fori_loop(0, tm, drain, 0)


# ---------------------------------------------------------------------------
# Wrappers
# ---------------------------------------------------------------------------
def onehot_matmul(x, weight, *, compute_dtype=jnp.bfloat16, tm_max=512,
                  tk_max=512):
    """torch.matmul(x, weight) for one-hot x of shape (..., K).

    compute_dtype: MXU input dtype.  bf16 (default) is exact for 0/1 one-hot
    x and rounds the weight to bf16 (<=2^-9 relative error); pass
    jnp.float32 for exact torch.matmul semantics with arbitrary float x.
    """
    *lead, K = x.shape
    Kw, E = weight.shape
    assert K == Kw, f"one-hot width {K} != vocab {Kw}"
    out_dtype = jnp.promote_types(x.dtype, weight.dtype)

    M = int(math.prod(lead)) if lead else 1
    x2 = x.reshape(M, K).astype(compute_dtype)
    w_c = weight.astype(compute_dtype)

    # <=7-row tail pad so the sublane dim is a multiple of 8; ragged M tiles
    # beyond that are handled by output-block boundary masking.
    M8 = _round_up(max(M, 1), 8)
    if M8 != M:
        x2 = jnp.pad(x2, ((0, M8 - M), (0, 0)))

    # Lane-dense output: pad E (weight only -- cheap) up to a multiple of 128.
    Ep = _round_up(E, 128)
    if Ep != E:
        w_c = jnp.pad(w_c, ((0, 0), (0, Ep - E)))

    budget = _vmem_budget_bytes()
    itm = jnp.dtype(compute_dtype).itemsize

    def fit_tm(fixed_bytes, per_row_bytes):
        tm = min(tm_max, M8)
        while tm > 8 and fixed_bytes + tm * per_row_bytes > budget:
            tm = max(8, _round_up(tm // 2, 8))
        return tm

    # Scheme selection: keep the whole table resident in VMEM (grid-invariant
    # block, no K grid axis) when it fits comfortably; otherwise tile K and
    # accumulate into the f32 output block.
    w_resident_bytes = 2 * K * Ep * itm  # allow for both pipeline buffers
    resident = w_resident_bytes <= int(0.45 * budget)

    if resident:
        per_row = 2 * K * itm + 2 * Ep * 4        # x tile + f32 out tile (x2 buf)
        tm = fit_tm(w_resident_bytes, per_row)
        grid = (pl.cdiv(M8, tm),)
        kernel = _matmul_resident_kernel
        in_specs = [
            pl.BlockSpec((tm, K), lambda i: (i, 0)),
            pl.BlockSpec((K, Ep), lambda i: (0, 0)),   # grid-invariant weight
        ]
        out_specs = pl.BlockSpec((tm, Ep), lambda i: (i, 0))
        dim_sem = ("parallel",)
        vmem_need = w_resident_bytes + tm * per_row
    else:
        # TODO(synk): for extremely large E an additional N(E)-tiling axis
        # would shrink the f32 output block further.
        tk = min(tk_max, _round_up(K, 128))
        fixed_at = lambda t: 2 * t * Ep * itm
        per_row_at = lambda t: 2 * t * itm + 2 * Ep * 4
        while tk > 128 and fixed_at(tk) + 8 * per_row_at(tk) > budget:
            tk = max(128, (tk // 2) // 128 * 128)
        tm = fit_tm(fixed_at(tk), per_row_at(tk))
        grid = (pl.cdiv(M8, tm), pl.cdiv(K, tk))
        kernel = functools.partial(_matmul_ktiled_kernel, K=K, tk=tk)
        in_specs = [
            pl.BlockSpec((tm, tk), lambda i, k: (i, k)),
            pl.BlockSpec((tk, Ep), lambda i, k: (k, 0)),
        ]
        out_specs = pl.BlockSpec((tm, Ep), lambda i, k: (i, 0))
        dim_sem = ("parallel", "arbitrary")
        vmem_need = fixed_at(tk) + tm * per_row_at(tk)

    vmem_limit = int(min(max(vmem_need + (4 << 20), 32 << 20), budget))

    out = pl.pallas_call(
        kernel,
        out_shape=jax.ShapeDtypeStruct((M8, Ep), jnp.float32),
        grid_spec=pltpu.PrefetchScalarGridSpec(
            num_scalar_prefetch=0,
            grid=grid,
            in_specs=in_specs,
            out_specs=out_specs,
        ),
        compiler_params=pltpu.CompilerParams(
            dimension_semantics=dim_sem,
            vmem_limit_bytes=vmem_limit,
        ),
    )(x2, w_c)

    out = out[:M, :E]
    if out.dtype != out_dtype:
        out = out.astype(out_dtype)
    return out.reshape(*lead, E)


def embedding_gather(idx, weight, *, tm_max=256):
    """weight[idx] (exact row lookup) for integer idx of shape (...,)."""
    lead = idx.shape
    K, E = weight.shape
    M = int(math.prod(lead)) if lead else 1

    # Clamp so an out-of-range id can never trigger an unchecked OOB DMA.
    ids = jnp.clip(idx.reshape(M).astype(jnp.int32), 0, K - 1)

    tm = min(tm_max, _round_up(max(M, 1), 8))
    Mp = _round_up(M, tm)
    if Mp != M:
        # Padded ids gather row 0; those rows are sliced off below.
        ids = jnp.pad(ids, (0, Mp - M))

    # TODO(synk): for very large M the flat (Mp,) scalar-prefetch buffer pads
    # to next_pow2(4*Mp) bytes of SMEM; chunk the call (or block the ids into
    # SMEM per grid step) if that ever becomes a limit.  A resident-table
    # vectorized gather could also be added as a fast path for tiny vocabs.
    budget = _vmem_budget_bytes()
    vmem_need = 2 * tm * E * weight.dtype.itemsize + (1 << 20)
    vmem_limit = int(min(max(vmem_need, 32 << 20), budget))

    out = pl.pallas_call(
        _gather_dma_kernel,
        out_shape=jax.ShapeDtypeStruct((Mp, E), weight.dtype),
        grid_spec=pltpu.PrefetchScalarGridSpec(
            num_scalar_prefetch=1,
            grid=(Mp // tm,),
            in_specs=[pl.BlockSpec(memory_space=pl.ANY)],   # table stays in HBM
            out_specs=pl.BlockSpec((tm, E), lambda i, ids_ref: (i, 0)),
            scratch_shapes=[pltpu.SemaphoreType.DMA((1,))],
        ),
        compiler_params=pltpu.CompilerParams(
            dimension_semantics=("arbitrary",),
            vmem_limit_bytes=vmem_limit,
        ),
    )(ids, weight)
    return out[:M].reshape(*lead, E)


# ---------------------------------------------------------------------------
# Module
# ---------------------------------------------------------------------------
class EmbeddingOneHot:
    """JAX/Pallas port of the PyTorch EmbeddingOneHot module."""

    def __init__(self, input_dim, embedding_dim, padding_idx=None, *, key):
        self.input_dim = input_dim
        self.embedding_dim = embedding_dim
        self.padding_idx = padding_idx
        # nn.init.normal_ -> standard normal, deterministic via PRNG key
        w = jax.random.normal(key, (input_dim, embedding_dim), dtype=jnp.float32)
        if padding_idx is not None:
            w = w.at[padding_idx].set(0.0)
        self.weight = w

    def __call__(self, x, one_hot=True):
        if one_hot:
            return onehot_matmul(x, self.weight)
        return embedding_gather(x, self.weight)


# ---------------------------------------------------------------------------
# Demo / smoke test
# ---------------------------------------------------------------------------
if __name__ == "__main__":
    key = jax.random.PRNGKey(0)
    k_w, k_idx = jax.random.split(key)

    input_dim = 64      # vocab size
    embedding_dim = 32  # hidden
    batch, seq = 2, 8

    emb = EmbeddingOneHot(input_dim, embedding_dim, padding_idx=0, key=k_w)

    idx = jax.random.randint(k_idx, (batch, seq), 0, input_dim, dtype=jnp.int32)
    x_onehot = jax.nn.one_hot(idx, input_dim, dtype=jnp.float32)  # (2, 8, 64)

    # For a true one-hot input the exact math answer for both paths is a row
    # lookup of the f32 weight.
    ref = emb.weight[idx]

    # one_hot=True path: bf16 MXU matmul against the resident padded table.
    out_mm = jax.block_until_ready(emb(x_onehot, one_hot=True))
    assert out_mm.shape == (batch, seq, embedding_dim)
    assert out_mm.dtype == emb.weight.dtype
    assert jnp.allclose(out_mm, ref, atol=1e-2, rtol=1e-2), "matmul path mismatch"

    # one_hot=False path: per-row DMA gather from the HBM table (exact rows).
    out_gather = jax.block_until_ready(emb(idx, one_hot=False))
    assert out_gather.shape == (batch, seq, embedding_dim)
    assert out_gather.dtype == emb.weight.dtype
    assert jnp.allclose(out_gather, ref, atol=1e-6, rtol=0.0), "gather path mismatch"

    print("KERNEL_OK")
</pallas_src>

<mosaic_0001>
module attributes {stable_mosaic.version = 11 : i64} {
  func.func @_matmul_resident_kernel(%arg0: i32, %arg1: memref<16x64xbf16, #tpu.memory_space<vmem>>, %arg2: memref<64x128xbf16, #tpu.memory_space<vmem>>, %arg3: memref<16x128xf32, #tpu.memory_space<vmem>>) attributes {dimension_semantics = [#tpu.dimension_semantics<parallel>], iteration_bounds = array<i64: 1>, scalar_prefetch = 0 : i64, scratch_operands = 0 : i64, tpu.core_type = #tpu.core_type<tc>, window_params = [{transform_indices = @transform_0, window_bounds = array<i64: 16, 64>}, {pipeline_mode = #tpu.pipeline_mode<synchronous>, transform_indices = @transform_1, window_bounds = array<i64: 64, 128>}, {transform_indices = @transform_2, window_bounds = array<i64: 16, 128>}]} {
    %c0 = arith.constant 0 : index
    %c0_0 = arith.constant 0 : index
    %0 = vector.load %arg1[%c0, %c0_0] : memref<16x64xbf16, #tpu.memory_space<vmem>>, vector<16x64xbf16>
    %c0_1 = arith.constant 0 : index
    %c0_2 = arith.constant 0 : index
    %1 = vector.load %arg2[%c0_1, %c0_2] : memref<64x128xbf16, #tpu.memory_space<vmem>>, vector<64x128xbf16>
    %cst = arith.constant dense<0.000000e+00> : vector<16x128xf32>
    %2 = tpu.matmul %0, %1, %cst {dimension_numbers = #tpu.dot_dimension_numbers<[1], [0], [0], [1], [0, 0, 1, 1], [], []>} : vector<16x64xbf16>, vector<64x128xbf16>, vector<16x128xf32> -> vector<16x128xf32>
    %c0_3 = arith.constant 0 : index
    %c0_4 = arith.constant 0 : index
    %3 = vector.load %arg3[%c0_3, %c0_4] : memref<16x128xf32, #tpu.memory_space<vmem>>, vector<16x128xf32>
    tpu.vector_store %arg3[%c0_3, %c0_4], %2 {strides = array<i32>} : memref<16x128xf32, #tpu.memory_space<vmem>>, vector<16x128xf32>,
    return
  }
  func.func @transform_0(%arg0: i32) -> (i32, i32) {
    %c0_i32 = arith.constant 0 : i32
    %c0_i32_0 = arith.constant 0 : i32
    return %arg0, %c0_i32 : i32, i32
  }
  func.func @transform_1(%arg0: i32) -> (i32, i32) {
    %c0_i32 = arith.constant 0 : i32
    %c0_i32_0 = arith.constant 0 : i32
    %c0_i32_1 = arith.constant 0 : i32
    return %c0_i32, %c0_i32_0 : i32, i32
  }
  func.func @transform_2(%arg0: i32) -> (i32, i32) {
    %c0_i32 = arith.constant 0 : i32
    %c0_i32_0 = arith.constant 0 : i32
    return %arg0, %c0_i32 : i32, i32
  }
}

</mosaic_0001>

<llo_original>
// kernel: tpu_custom_call.1
$region0: #{tpu_custom_call.1}
  #allocation0 [shape = 'u32[]', space=smem, size = 0x4, offset = 0x4, fixed_abs, tag = 'smem constant byte address 0x4 - core index']
  #allocation1 [shape = 'u32[144,128]{1,0:T(1,128)}', space=vmem, size = 0x12000, scoped, tag = 'internal scratch']
  %s0 = inlined_call_operand.hbm [shape: bf16[16,64], index: 0, kind: input, shape index: {}]
  %s1 = inlined_call_operand.hbm [shape: bf16[64,128], index: 1, kind: input, shape index: {}]
  %s2 = inlined_call_operand.hbm [shape: f32[16,128], index: 2, kind: output, shape index: {}]
  %s3 = sld [smem:[#allocation0]]
  $region26: #{tpu_custom_call.1} parent=0
    _
  %s5 = ssub.s32 1, %s3
  %s6 = scalar_select 0, %s5, %s3
  $region1: #{tpu_custom_call.1} parent=0
    #allocation2 [shape = 'u8[4096]{0}', space=vmem, size = 0x1000, scoped, tag = 'input window, operand 0, single buffered']
    #allocation3 [shape = 's32[1]{0}', space=sflag, size = 0x4, scoped, tag = 'scoped memory for tpu_custom_call.1']
    #allocation4 [shape = 's32[1]{0}', space=sflag, size = 0x4, scoped, tag = 'scoped memory for tpu_custom_call.1']
    #allocation5 [shape = 'u8[16384]{0}', space=vmem, size = 0x4000, scoped, tag = 'input window, operand 1, single buffered']
    #allocation6 [shape = 's32[1]{0}', space=sflag, size = 0x4, scoped, tag = 'scoped memory for tpu_custom_call.1']
    #allocation7 [shape = 'u8[8192]{0}', space=vmem, size = 0x2000, scoped, tag = 'output window, operand 0, single buffered']
    %7 = vsyncpa [#allocation3], 0
    %8 = vsyncpa [#allocation6], 0
    %9 = vsyncpa [#allocation4], 0
    // Predicated region
    $region2: #{tpu_custom_call.1} parent=1 // pred_check
      _
    $region3: #{tpu_custom_call.1} parent=1 // pred_check_branch
      %11 = sbr.rel (0) target = $region5
    $region4: #{tpu_custom_call.1} parent=1 // pred_region
      %s13 = ssub.s32 128, 128
      %14 = vsyncadd [#allocation3], %s13
      %s15 = sshll.u32 [#allocation2], 4
      %s16 = int_to_ptr.vmem [resolvable:$true] %s15
      %21 = dma.hbm_to_vmem [thread:$0]  %s0, 128, %s16, [#allocation3], 64, 64, 4
    $region5: #{tpu_custom_call.1} parent=1 // pred_fallthru
      _
    // Predicated region
    $region6: #{tpu_custom_call.1} parent=1 // pred_check
      _
    $region7: #{tpu_custom_call.1} parent=1 // pred_check_branch
      %23 = sbr.rel (0) target = $region9
    $region8: #{tpu_custom_call.1} parent=1 // pred_region
      %s25 = ssub.s32 512, 512
      %26 = vsyncadd [#allocation6], %s25
      %s27 = sshll.u32 [#allocation5], 4
      %s28 = int_to_ptr.vmem [resolvable:$true] %s27
      %33 = dma.hbm_to_vmem [thread:$0]  %s1, 512, %s28, [#allocation6], 64, 64, 4
    $region9: #{tpu_custom_call.1} parent=1 // pred_fallthru
      _
    // Predicated region
    $region10: #{tpu_custom_call.1} parent=1 // pred_check
      _
    $region11: #{tpu_custom_call.1} parent=1 // pred_check_branch
      %35 = sbr.rel (0) target = $region13
    $region12: #{tpu_custom_call.1} parent=1 // pred_region
      %36 = dma.done [#allocation3], 128
    $region13: #{tpu_custom_call.1} parent=1 // pred_fallthru
      _
    // Predicated region
    $region14: #{tpu_custom_call.1} parent=1 // pred_check
      _
    $region15: #{tpu_custom_call.1} parent=1 // pred_check_branch
      %38 = sbr.rel (0) target = $region17
    $region16: #{tpu_custom_call.1} parent=1 // pred_region
      %39 = dma.done [#allocation6], 512
    $region17: #{tpu_custom_call.1} parent=1 // pred_fallthru
      _
    %v41 = vld [vmem:[#allocation2] sm:$0xf]
    %v42 = vld [vmem:[#allocation2 + $0x4] sm:$0xf]
    %v43 = vld [vmem:[#allocation5] sm:$0xf]
    %v44 = vld [vmem:[#allocation5 + $0x4] sm:$0xf]
    %v45 = vld [vmem:[#allocation5 + $0x8] sm:$0xf]
    %v46 = vld [vmem:[#allocation5 + $0xc] sm:$0xf]
    %v47 = vld [vmem:[#allocation5 + $0x10] sm:$0xf]
    %v48 = vld [vmem:[#allocation5 + $0x14] sm:$0xf]
    %v49 = vld [vmem:[#allocation5 + $0x18] sm:$0xf]
    %v50 = vld [vmem:[#allocation5 + $0x1c] sm:$0xf]
    %v53 = vunpack.c.l.b16 %v41
    %v54 = vunpack.c.l.b16 %v42
    %v55 = vpack.c.b16 %v54, %v53
    %v64 = vunpack.c.l.b16 %v43
    %v65 = vunpack.c.l.b16 %v44
    %v66 = vunpack.c.l.b16 %v45
    %v67 = vunpack.c.l.b16 %v46
    %v68 = vunpack.c.l.b16 %v47
    %v69 = vunpack.c.l.b16 %v48
    %v70 = vunpack.c.l.b16 %v49
    %v71 = vunpack.c.l.b16 %v50
    %v72 = vpack.c.b16 %v65, %v64
    %v73 = vpack.c.b16 %v67, %v66
    %v74 = vpack.c.b16 %v69, %v68
    %v75 = vpack.c.b16 %v71, %v70
    %vm80 = vcmask 523264
    %v82 = vsel %vm80, %v55, 0
    %84 = vmatprep.subr.bf16.mxu0 0
    %85 = vmatpush1.bf16.msra.mxu0 %v72
    %86 = vmatprep.subr.bf16.mxu0 0
    %87 = vmatpush1.bf16.msra.mxu0 %v73
    %88 = vmatprep.subr.bf16.mxu0 0
    %89 = vmatpush1.bf16.msra.mxu0 %v74
    %90 = vmatprep.subr.bf16.mxu0 0
    %91 = vmatpush1.bf16.msra.mxu0 %v75
    %92 = vmatprep.subr.bf16.mxu0 0
    %93 = vmatpush1.bf16.msra.mxu0 0
    %94 = vmatprep.subr.bf16.mxu0 0
    %95 = vmatpush1.bf16.msra.mxu0 0
    %96 = vmatprep.subr.bf16.mxu0 0
    %97 = vmatpush1.bf16.msra.mxu0 0
    %98 = vmatprep.subr.bf16.mxu0 0
    %99 = vmatpush1.bf16.msra.mxu0 0
    %100 = vmatprep.subr.bf16.mxu0 0
    %101 = vmatpush1.bf16.msra.mxu0 0
    %102 = vmatprep.subr.bf16.mxu0 0
    %103 = vmatpush1.bf16.msra.mxu0 0
    %104 = vmatprep.subr.bf16.mxu0 0
    %105 = vmatpush1.bf16.msra.mxu0 0
    %106 = vmatprep.subr.bf16.mxu0 0
    %107 = vmatpush1.bf16.msra.mxu0 0
    %108 = vmatprep.subr.bf16.mxu0 0
    %109 = vmatpush1.bf16.msra.mxu0 0
    %110 = vmatprep.subr.bf16.mxu0 0
    %111 = vmatpush1.bf16.msra.mxu0 0
    %112 = vmatprep.subr.bf16.mxu0 0
    %113 = vmatpush1.bf16.msra.mxu0 0
    %114 = vmatprep.subr.bf16.mxu0 0
    %115 = vmatpush1.bf16.msra.mxu0 0
    %116 = vmatprep.mubr.bf16.mxu0 0
    %117 = vmatmul.mubr.bf16.gmra.mrb[0].mxu0 %v82
    %v118 = vpop.f32.mrb[0].mxu0
    %v119 = vadd.f32 0.0, %v118
    %v120 = vpop.f32.mrb[0].mxu0
    %v121 = vpop.f32.mrb[0].mxu0
    %v122 = vadd.f32 0.0, %v121
    %v123 = vpop.f32.mrb[0].mxu0
    %124 = vdwg.mxu0
    %125 = vst [vmem:[#allocation7] sm:$0xff] %v119
    %126 = vst [vmem:[#allocation7 + $0x8] sm:$0xff] %v122
    // Predicated region
    $region18: #{tpu_custom_call.1} parent=1 // pred_check
      _
    $region19: #{tpu_custom_call.1} parent=1 // pred_check_branch
      %128 = sbr.rel (0) target = $region21
    $region20: #{tpu_custom_call.1} parent=1 // pred_region
      %s130 = ssub.s32 256, 256
      %131 = vsyncadd [#allocation4], %s130
      %s132 = sshll.u32 [#allocation7], 4
      %s133 = int_to_ptr.vmem [resolvable:$true] %s132
      %138 = dma.vmem_to_hbm [thread:$0]  %s133, 256, %s2, [#allocation4], 128, 128, 8
    $region21: #{tpu_custom_call.1} parent=1 // pred_fallthru
      _
    // Predicated region
    $region22: #{tpu_custom_call.1} parent=1 // pred_check
      _
    $region23: #{tpu_custom_call.1} parent=1 // pred_check_branch
      %140 = sbr.rel (0) target = $region25
    $region24: #{tpu_custom_call.1} parent=1 // pred_region
      %141 = dma.done [#allocation4], 256
    $region25: #{tpu_custom_call.1} parent=1 // pred_fallthru
      _
    %142 = vsyncpa [#allocation3], 1
    %143 = vsyncpa [#allocation6], 1
    %144 = vsyncpa [#allocation4], 1

</llo_original>
